<compile_context>
chip_gen: v5e
topology: v5e:2x2
jax: 0.10.0
libtpu: 0.0.40
codegen_flags: <defaults>
</compile_context>

<pallas_src>
import jax
import jax.numpy as jnp
from jax.experimental import pallas as pl
from jax.experimental.pallas import tpu as pltpu

LANE = 128  # lane width; all feature axes are zero-padded to this


def _round_up(n, m):
    return ((n + m - 1) // m) * m


def _mlp_kernel(x_ref, w1_ref, b1_ref, w2_ref, b2_ref, w3_ref, b3_ref, o_ref):
    # fc1 + bias + ReLU (dropout is identity in eval mode).
    x = x_ref[...].astype(w1_ref.dtype)
    h = jnp.dot(x, w1_ref[...], preferred_element_type=jnp.float32) + b1_ref[...]
    h = jnp.maximum(h, 0.0)

    # BatchNorm1d(hidden) is pre-folded into w2/b2; fc2 + ReLU.
    h = jnp.dot(h.astype(w2_ref.dtype), w2_ref[...],
                preferred_element_type=jnp.float32) + b2_ref[...]
    h = jnp.maximum(h, 0.0)

    # BatchNorm1d(hidden//2) is pre-folded into w3/b3; fc3.
    o_ref[...] = jnp.dot(h.astype(w3_ref.dtype), w3_ref[...],
                         preferred_element_type=jnp.float32) + b3_ref[...]


def pack_params(params, eps=1e-5, weight_dtype=jnp.bfloat16):
    """One-time parameter packing: BN fold, transpose, lane padding, dtype cast.

    Call once at init / checkpoint load; NOT on the per-forward path.
    """
    (w1, b1, w2, b2, w3, b3, g2, be2, m2, v2, g3, be3, m3, v3) = params

    # Eval-mode BatchNorm -> per-feature scale/shift.
    s2 = g2 / jnp.sqrt(v2 + eps)
    t2 = be2 - m2 * s2
    s3 = g3 / jnp.sqrt(v3 + eps)
    t3 = be3 - m3 * s3

    # Fold BN into the *following* linear layer:
    #   (h*s + t) @ Wt + b == h @ (s[:,None]*Wt) + (t @ Wt + b)
    w1t = w1.T                              # (in,        hidden)
    w2t = s2[:, None] * w2.T                # (hidden,    hidden//2)
    b2f = t2 @ w2.T + b2
    w3t = s3[:, None] * w3.T                # (hidden//2, out)
    b3f = t3 @ w3.T + b3

    def pad2(a, rows, cols):
        return jnp.pad(a, ((0, rows - a.shape[0]), (0, cols - a.shape[1])))

    def pad1(v, n):
        return jnp.pad(v, (0, n - v.shape[0]))

    in_dim = w1t.shape[0]
    w1p = pad2(w1t, in_dim, LANE).astype(weight_dtype)   # (in,  128)
    w2p = pad2(w2t, LANE, LANE).astype(weight_dtype)     # (128, 128)
    w3p = pad2(w3t, LANE, LANE).astype(weight_dtype)     # (128, 128)
    b1p = pad1(b1, LANE).reshape(1, LANE).astype(jnp.float32)
    b2p = pad1(b2f, LANE).reshape(1, LANE).astype(jnp.float32)
    b3p = pad1(b3f, LANE).reshape(1, LANE).astype(jnp.float32)

    out_dim = w3.shape[0]
    return (w1p, b1p, w2p, b2p, w3p, b3p, out_dim)


def make_mlp_forward(packed, max_tile_b=128):
    """Build a jitted forward closed over packed params.

    Returned fn: (x (B, input_dim, 1) f32, t unused) -> (out (B, out_dim, 1), None)
    """
    w1p, b1p, w2p, b2p, w3p, b3p, out_dim = packed
    in_dim = w1p.shape[0]

    def _const_spec(arr):
        # Full-array block, constant block index -> DMA'd once, resident in VMEM
        # across all grid steps (weights/biases).
        return pl.BlockSpec(arr.shape, lambda i: (0, 0))

    @jax.jit
    def fwd(x, t=None, return_dict=False):
        del t, return_dict
        B = x.shape[0]
        x2d = jnp.squeeze(x, axis=-1)                     # (B, in_dim)

        # Batch tile: multiple of 16 (bf16 sublane packing), capped at max_tile_b.
        tile_b = min(max_tile_b, _round_up(B, 16))
        b_pad = _round_up(B, tile_b)
        if b_pad != B:
            x2d = jnp.pad(x2d, ((0, b_pad - B), (0, 0)))

        outp = pl.pallas_call(
            _mlp_kernel,
            out_shape=jax.ShapeDtypeStruct((b_pad, LANE), jnp.float32),
            grid_spec=pltpu.PrefetchScalarGridSpec(
                num_scalar_prefetch=0,
                grid=(b_pad // tile_b,),
                in_specs=[
                    pl.BlockSpec((tile_b, in_dim), lambda i: (i, 0)),   # x tile
                    _const_spec(w1p), _const_spec(b1p),
                    _const_spec(w2p), _const_spec(b2p),
                    _const_spec(w3p), _const_spec(b3p),
                ],
                out_specs=pl.BlockSpec((tile_b, LANE), lambda i: (i, 0)),
            ),
            compiler_params=pltpu.CompilerParams(
                dimension_semantics=("parallel",)),       # shards across v7x's 2 TCs
        )(x2d, w1p, b1p, w2p, b2p, w3p, b3p)

        return outp[:B, :out_dim, None], None             # (B, out_dim, 1)

    return fwd


def init_params(key, input_dim, hidden_dim, output_dim):
    """Raw (torch-layout) parameters, matching nn.Linear / nn.BatchNorm1d."""
    h2 = hidden_dim // 2
    ks = jax.random.split(key, 12)

    def lin(kw, kb, out_d, in_d):
        bound = 1.0 / jnp.sqrt(in_d)
        w = jax.random.uniform(kw, (out_d, in_d), jnp.float32, -bound, bound)
        b = jax.random.uniform(kb, (out_d,), jnp.float32, -bound, bound)
        return w, b

    w1, b1 = lin(ks[0], ks[1], hidden_dim, input_dim)
    w2, b2 = lin(ks[2], ks[3], h2, hidden_dim)
    w3, b3 = lin(ks[4], ks[5], output_dim, h2)

    # BatchNorm params (non-trivial so the affine/running-stats path is exercised).
    g2 = 1.0 + 0.1 * jax.random.normal(ks[6], (hidden_dim,), jnp.float32)
    be2 = 0.1 * jax.random.normal(ks[7], (hidden_dim,), jnp.float32)
    m2 = 0.05 * jax.random.normal(ks[8], (hidden_dim,), jnp.float32)
    v2 = 1.0 + 0.1 * jnp.abs(jax.random.normal(ks[9], (hidden_dim,), jnp.float32))

    g3 = 1.0 + 0.1 * jax.random.normal(ks[10], (h2,), jnp.float32)
    be3 = 0.1 * jax.random.normal(ks[11], (h2,), jnp.float32)
    m3 = jnp.zeros((h2,), jnp.float32)
    v3 = jnp.ones((h2,), jnp.float32)

    return (w1, b1, w2, b2, w3, b3, g2, be2, m2, v2, g3, be3, m3, v3)


if __name__ == "__main__":
    # TODO(synk): dropout implemented as identity (eval-mode semantics); training-mode
    # dropout masks / batch-statistics BatchNorm are not reproduced.
    # B=256 so the MXU sees full 128-row tiles and the batch grid has 2 steps
    # (weights stay resident across them); feature dims stay at the module's sizes.
    B, INPUT_DIM, HIDDEN_DIM, OUTPUT_DIM = 256, 16, 32, 8

    key = jax.random.PRNGKey(0)
    kx, kp = jax.random.split(key)
    x = jax.random.normal(kx, (B, INPUT_DIM, 1), jnp.float32)
    t = jnp.zeros((B,), jnp.float32)      # unused by forward, kept for parity
    params = init_params(kp, INPUT_DIM, HIDDEN_DIM, OUTPUT_DIM)

    packed = pack_params(params)          # one-time prep (off the hot path)
    mlp_forward = make_mlp_forward(packed)

    out, aux = mlp_forward(x, t)
    out = jax.block_until_ready(out)

    # Pure-JAX f32 reference of the original module semantics (eval mode).
    (w1, b1, w2, b2, w3, b3, g2, be2, m2, v2, g3, be3, m3, v3) = params
    eps = 1e-5
    h = jnp.maximum(jnp.squeeze(x, -1) @ w1.T + b1, 0.0)
    h = (h - m2) / jnp.sqrt(v2 + eps) * g2 + be2
    h = jnp.maximum(h @ w2.T + b2, 0.0)
    h = (h - m3) / jnp.sqrt(v3 + eps) * g3 + be3
    ref = (h @ w3.T + b3)[..., None]

    assert out.shape == (B, OUTPUT_DIM, 1)
    assert aux is None
    # Relaxed tolerance: kernel uses bf16 operands on the MXU (f32 accumulate).
    assert jnp.allclose(out, ref, atol=5e-2, rtol=5e-2), float(
        jnp.max(jnp.abs(out - ref)))
    print("KERNEL_OK")
</pallas_src>

<mosaic_0001>
module attributes {stable_mosaic.version = 11 : i64} {
  func.func @_mlp_kernel(%arg0: i32, %arg1: memref<128x16xf32, #tpu.memory_space<vmem>>, %arg2: memref<16x128xbf16, #tpu.memory_space<vmem>>, %arg3: memref<1x128xf32, #tpu.memory_space<vmem>>, %arg4: memref<128x128xbf16, #tpu.memory_space<vmem>>, %arg5: memref<1x128xf32, #tpu.memory_space<vmem>>, %arg6: memref<128x128xbf16, #tpu.memory_space<vmem>>, %arg7: memref<1x128xf32, #tpu.memory_space<vmem>>, %arg8: memref<128x128xf32, #tpu.memory_space<vmem>>) attributes {dimension_semantics = [#tpu.dimension_semantics<parallel>], iteration_bounds = array<i64: 2>, scalar_prefetch = 0 : i64, scratch_operands = 0 : i64, tpu.core_type = #tpu.core_type<tc>, window_params = [{transform_indices = @transform_0, window_bounds = array<i64: 128, 16>}, {pipeline_mode = #tpu.pipeline_mode<synchronous>, transform_indices = @transform_1, window_bounds = array<i64: 16, 128>}, {pipeline_mode = #tpu.pipeline_mode<synchronous>, transform_indices = @transform_2, window_bounds = array<i64: 1, 128>}, {pipeline_mode = #tpu.pipeline_mode<synchronous>, transform_indices = @transform_3, window_bounds = array<i64: 128, 128>}, {pipeline_mode = #tpu.pipeline_mode<synchronous>, transform_indices = @transform_4, window_bounds = array<i64: 1, 128>}, {pipeline_mode = #tpu.pipeline_mode<synchronous>, transform_indices = @transform_5, window_bounds = array<i64: 128, 128>}, {pipeline_mode = #tpu.pipeline_mode<synchronous>, transform_indices = @transform_6, window_bounds = array<i64: 1, 128>}, {transform_indices = @transform_7, window_bounds = array<i64: 128, 128>}]} {
    %c0 = arith.constant 0 : index
    %c0_0 = arith.constant 0 : index
    %0 = vector.load %arg1[%c0, %c0_0] : memref<128x16xf32, #tpu.memory_space<vmem>>, vector<128x16xf32>
    %1 = arith.truncf %0 : vector<128x16xf32> to vector<128x16xbf16>
    %c0_1 = arith.constant 0 : index
    %c0_2 = arith.constant 0 : index
    %2 = vector.load %arg2[%c0_1, %c0_2] : memref<16x128xbf16, #tpu.memory_space<vmem>>, vector<16x128xbf16>
    %cst = arith.constant dense<0.000000e+00> : vector<128x128xf32>
    %3 = tpu.matmul %1, %2, %cst {dimension_numbers = #tpu.dot_dimension_numbers<[1], [0], [0], [1], [0, 0, 1, 1], [], []>} : vector<128x16xbf16>, vector<16x128xbf16>, vector<128x128xf32> -> vector<128x128xf32>
    %c0_3 = arith.constant 0 : index
    %c0_4 = arith.constant 0 : index
    %4 = vector.load %arg3[%c0_3, %c0_4] : memref<1x128xf32, #tpu.memory_space<vmem>>, vector<1x128xf32>
    %5 = vector.broadcast %4 : vector<1x128xf32> to vector<128x128xf32>
    %6 = arith.addf %3, %5 : vector<128x128xf32>
    %cst_5 = arith.constant 0.000000e+00 : f32
    %7 = vector.broadcast %cst_5 : f32 to vector<128x128xf32>
    %8 = arith.maximumf %6, %7 : vector<128x128xf32>
    %9 = arith.truncf %8 : vector<128x128xf32> to vector<128x128xbf16>
    %c0_6 = arith.constant 0 : index
    %c0_7 = arith.constant 0 : index
    %10 = vector.load %arg4[%c0_6, %c0_7] : memref<128x128xbf16, #tpu.memory_space<vmem>>, vector<128x128xbf16>
    %cst_8 = arith.constant dense<0.000000e+00> : vector<128x128xf32>
    %11 = tpu.matmul %9, %10, %cst_8 {dimension_numbers = #tpu.dot_dimension_numbers<[1], [0], [0], [1], [0, 0, 1, 1], [], []>} : vector<128x128xbf16>, vector<128x128xbf16>, vector<128x128xf32> -> vector<128x128xf32>
    %c0_9 = arith.constant 0 : index
    %c0_10 = arith.constant 0 : index
    %12 = vector.load %arg5[%c0_9, %c0_10] : memref<1x128xf32, #tpu.memory_space<vmem>>, vector<1x128xf32>
    %13 = vector.broadcast %12 : vector<1x128xf32> to vector<128x128xf32>
    %14 = arith.addf %11, %13 : vector<128x128xf32>
    %cst_11 = arith.constant 0.000000e+00 : f32
    %15 = vector.broadcast %cst_11 : f32 to vector<128x128xf32>
    %16 = arith.maximumf %14, %15 : vector<128x128xf32>
    %17 = arith.truncf %16 : vector<128x128xf32> to vector<128x128xbf16>
    %c0_12 = arith.constant 0 : index
    %c0_13 = arith.constant 0 : index
    %18 = vector.load %arg6[%c0_12, %c0_13] : memref<128x128xbf16, #tpu.memory_space<vmem>>, vector<128x128xbf16>
    %cst_14 = arith.constant dense<0.000000e+00> : vector<128x128xf32>
    %19 = tpu.matmul %17, %18, %cst_14 {dimension_numbers = #tpu.dot_dimension_numbers<[1], [0], [0], [1], [0, 0, 1, 1], [], []>} : vector<128x128xbf16>, vector<128x128xbf16>, vector<128x128xf32> -> vector<128x128xf32>
    %c0_15 = arith.constant 0 : index
    %c0_16 = arith.constant 0 : index
    %20 = vector.load %arg7[%c0_15, %c0_16] : memref<1x128xf32, #tpu.memory_space<vmem>>, vector<1x128xf32>
    %21 = vector.broadcast %20 : vector<1x128xf32> to vector<128x128xf32>
    %22 = arith.addf %19, %21 : vector<128x128xf32>
    %c0_17 = arith.constant 0 : index
    %c0_18 = arith.constant 0 : index
    %23 = vector.load %arg8[%c0_17, %c0_18] : memref<128x128xf32, #tpu.memory_space<vmem>>, vector<128x128xf32>
    tpu.vector_store %arg8[%c0_17, %c0_18], %22 {strides = array<i32>} : memref<128x128xf32, #tpu.memory_space<vmem>>, vector<128x128xf32>,
    return
  }
  func.func @transform_0(%arg0: i32) -> (i32, i32) {
    %c0_i32 = arith.constant 0 : i32
    %c0_i32_0 = arith.constant 0 : i32
    return %arg0, %c0_i32 : i32, i32
  }
  func.func @transform_1(%arg0: i32) -> (i32, i32) {
    %c0_i32 = arith.constant 0 : i32
    %c0_i32_0 = arith.constant 0 : i32
    %c0_i32_1 = arith.constant 0 : i32
    return %c0_i32, %c0_i32_0 : i32, i32
  }
  func.func @transform_2(%arg0: i32) -> (i32, i32) {
    %c0_i32 = arith.constant 0 : i32
    %c0_i32_0 = arith.constant 0 : i32
    %c0_i32_1 = arith.constant 0 : i32
    return %c0_i32, %c0_i32_0 : i32, i32
  }
  func.func @transform_3(%arg0: i32) -> (i32, i32) {
    %c0_i32 = arith.constant 0 : i32
    %c0_i32_0 = arith.constant 0 : i32
    %c0_i32_1 = arith.constant 0 : i32
    return %c0_i32, %c0_i32_0 : i32, i32
  }
  func.func @transform_4(%arg0: i32) -> (i32, i32) {
    %c0_i32 = arith.constant 0 : i32
    %c0_i32_0 = arith.constant 0 : i32
    %c0_i32_1 = arith.constant 0 : i32
    return %c0_i32, %c0_i32_0 : i32, i32
  }
  func.func @transform_5(%arg0: i32) -> (i32, i32) {
    %c0_i32 = arith.constant 0 : i32
    %c0_i32_0 = arith.constant 0 : i32
    %c0_i32_1 = arith.constant 0 : i32
    return %c0_i32, %c0_i32_0 : i32, i32
  }
  func.func @transform_6(%arg0: i32) -> (i32, i32) {
    %c0_i32 = arith.constant 0 : i32
    %c0_i32_0 = arith.constant 0 : i32
    %c0_i32_1 = arith.constant 0 : i32
    return %c0_i32, %c0_i32_0 : i32, i32
  }
  func.func @transform_7(%arg0: i32) -> (i32, i32) {
    %c0_i32 = arith.constant 0 : i32
    %c0_i32_0 = arith.constant 0 : i32
    return %arg0, %c0_i32 : i32, i32
  }
}

</mosaic_0001>

<llo_original>
// kernel: fwd.1
$region0: #{fwd.1}
  #allocation0 [shape = 'u32[]', space=smem, size = 0x4, offset = 0x4, fixed_abs, tag = 'smem constant byte address 0x4 - core index']
  #allocation1 [shape = 'u32[72,128]{1,0:T(1,128)}', space=vmem, size = 0x9000, scoped, tag = 'internal scratch']
  %s0 = inlined_call_operand.vmem [shape: f32[256,16], index: 0, kind: input, shape index: {}]
  %s1 = inlined_call_operand.vmem [shape: bf16[16,128], index: 1, kind: input, shape index: {}]
  %s2 = inlined_call_operand.vmem [shape: f32[1,128], index: 2, kind: input, shape index: {}]
  %s3 = inlined_call_operand.vmem [shape: bf16[128,128], index: 3, kind: input, shape index: {}]
  %s4 = inlined_call_operand.vmem [shape: f32[1,128], index: 4, kind: input, shape index: {}]
  %s5 = inlined_call_operand.vmem [shape: bf16[128,128], index: 5, kind: input, shape index: {}]
  %s6 = inlined_call_operand.vmem [shape: f32[1,128], index: 6, kind: input, shape index: {}]
  %s7 = inlined_call_operand.vmem [shape: f32[256,128], index: 7, kind: output, shape index: {}]
  %s8 = sld [smem:[#allocation0]]
  $region61: #{fwd.1} parent=0
    _
  %s10 = ssub.s32 1, %s8
  %s11 = scalar_select 0, %s10, %s8
  loop: start=0, step=1, limit=4
  $region2: #{fwd.1} parent=0 // loop_pre_header
    _
  $region3: #{fwd.1} parent=0 // loop_header
    %s13 = sphi 0, %s17
    %p14 = scmp.ge.s32.totalorder %s13, 4
    %s23 = sphi 0, %s25
    %s26 = sphi 0, %s23
    %s27 = sphi 0, %s26
    %s43 = sphi 0, %s27
    %s47 = sphi 0, %s47
    %s49 = sphi 0, %s47
    %s50 = sphi 0, %s49
    %s64 = sphi 0, %s50
    %s68 = sphi 0, %s68
    %s70 = sphi 0, %s68
    %s71 = sphi 0, %s70
    %s85 = sphi 0, %s71
    %s89 = sphi 0, %s89
    %s91 = sphi 0, %s89
    %s92 = sphi 0, %s91
    %s106 = sphi 0, %s92
    %s110 = sphi 0, %s110
    %s112 = sphi 0, %s110
    %s113 = sphi 0, %s112
    %s127 = sphi 0, %s113
    %s131 = sphi 0, %s131
    %s133 = sphi 0, %s131
    %s134 = sphi 0, %s133
    %s148 = sphi 0, %s134
    %s152 = sphi 0, %s152
    %s154 = sphi 0, %s152
    %s155 = sphi 0, %s154
    %s169 = sphi 0, %s155
    %s175 = sphi 0, %s177
    %s178 = sphi 0, %s175
    %s179 = sphi 0, %s178
    %s195 = sphi 0, %s179
  $region4: #{fwd.1} parent=0 // loop_header_branch
    %16 = sbr.rel (%p14) target = $region8
  $region5: #{fwd.1} parent=0 // loop_body
    %s18 = ssub.s32 %s13, 1
    %s19 = ssub.s32 %s13, 2
    %s20 = sadd.s32 %s13, 1
    %s21 = ssub.s32 %s13, %s20
    %p22 = scmp.eq.s32.totalorder %s21, 0
    %s24 = sadd.s32 %s23, 1
    %s25 = scalar_select %p22, %s23, %s24
    %p28 = pneg %p22
    %p29 = scmp.eq.s32.totalorder %s13, 1
    %p30 = por %p28, %p29
    %p31 = scmp.ne.s32.totalorder %s23, %s26
    %p32 = scmp.eq.s32.totalorder %s13, 0
    %p33 = por %p31, %p32
    %p34 = scmp.ne.s32.totalorder %s23, %s26
    %p35 = scmp.eq.s32.totalorder %s18, 1
    %p36 = por %p34, %p35
    %p37 = scmp.ne.s32.totalorder %s26, %s27
    %p38 = scmp.eq.s32.totalorder %s18, 0
    %p39 = por %p37, %p38
    %p40 = scmp.ne.s32.totalorder %s26, %s27
    %p41 = scmp.eq.s32.totalorder %s19, 1
    %p42 = por %p40, %p41
    %p44 = scmp.ne.s32.totalorder %s27, %s43
    %p45 = scmp.eq.s32.totalorder %s19, 0
    %p46 = por %p44, %p45
    %s48 = sadd.s32 %s47, 1
    %p51 = scmp.eq.s32.totalorder %s13, 1
    %p52 = scmp.ne.s32.totalorder %s47, %s49
    %p53 = scmp.eq.s32.totalorder %s13, 0
    %p54 = por %p52, %p53
    %p55 = scmp.ne.s32.totalorder %s47, %s49
    %p56 = scmp.eq.s32.totalorder %s18, 1
    %p57 = por %p55, %p56
    %p58 = scmp.ne.s32.totalorder %s49, %s50
    %p59 = scmp.eq.s32.totalorder %s18, 0
    %p60 = por %p58, %p59
    %p61 = scmp.ne.s32.totalorder %s49, %s50
    %p62 = scmp.eq.s32.totalorder %s19, 1
    %p63 = por %p61, %p62
    %p65 = scmp.ne.s32.totalorder %s50, %s64
    %p66 = scmp.eq.s32.totalorder %s19, 0
    %p67 = por %p65, %p66
    %s69 = sadd.s32 %s68, 1
    %p72 = scmp.eq.s32.totalorder %s13, 1
    %p73 = scmp.ne.s32.totalorder %s68, %s70
    %p74 = scmp.eq.s32.totalorder %s13, 0
    %p75 = por %p73, %p74
    %p76 = scmp.ne.s32.totalorder %s68, %s70
    %p77 = scmp.eq.s32.totalorder %s18, 1
    %p78 = por %p76, %p77
    %p79 = scmp.ne.s32.totalorder %s70, %s71
    %p80 = scmp.eq.s32.totalorder %s18, 0
    %p81 = por %p79, %p80
    %p82 = scmp.ne.s32.totalorder %s70, %s71
    %p83 = scmp.eq.s32.totalorder %s19, 1
    %p84 = por %p82, %p83
    %p86 = scmp.ne.s32.totalorder %s71, %s85
    %p87 = scmp.eq.s32.totalorder %s19, 0
    %p88 = por %p86, %p87
    %s90 = sadd.s32 %s89, 1
    %p93 = scmp.eq.s32.totalorder %s13, 1
    %p94 = scmp.ne.s32.totalorder %s89, %s91
    %p95 = scmp.eq.s32.totalorder %s13, 0
    %p96 = por %p94, %p95
    %p97 = scmp.ne.s32.totalorder %s89, %s91
    %p98 = scmp.eq.s32.totalorder %s18, 1
    %p99 = por %p97, %p98
    %p100 = scmp.ne.s32.totalorder %s91, %s92
    %p101 = scmp.eq.s32.totalorder %s18, 0
    %p102 = por %p100, %p101
    %p103 = scmp.ne.s32.totalorder %s91, %s92
    %p104 = scmp.eq.s32.totalorder %s19, 1
    %p105 = por %p103, %p104
    %p107 = scmp.ne.s32.totalorder %s92, %s106
    %p108 = scmp.eq.s32.totalorder %s19, 0
    %p109 = por %p107, %p108
    %s111 = sadd.s32 %s110, 1
    %p114 = scmp.eq.s32.totalorder %s13, 1
    %p115 = scmp.ne.s32.totalorder %s110, %s112
    %p116 = scmp.eq.s32.totalorder %s13, 0
    %p117 = por %p115, %p116
    %p118 = scmp.ne.s32.totalorder %s110, %s112
    %p119 = scmp.eq.s32.totalorder %s18, 1
    %p120 = por %p118, %p119
    %p121 = scmp.ne.s32.totalorder %s112, %s113
    %p122 = scmp.eq.s32.totalorder %s18, 0
    %p123 = por %p121, %p122
    %p124 = scmp.ne.s32.totalorder %s112, %s113
    %p125 = scmp.eq.s32.totalorder %s19, 1
    %p126 = por %p124, %p125
    %p128 = scmp.ne.s32.totalorder %s113, %s127
    %p129 = scmp.eq.s32.totalorder %s19, 0
    %p130 = por %p128, %p129
    %s132 = sadd.s32 %s131, 1
    %p135 = scmp.eq.s32.totalorder %s13, 1
    %p136 = scmp.ne.s32.totalorder %s131, %s133
    %p137 = scmp.eq.s32.totalorder %s13, 0
    %p138 = por %p136, %p137
    %p139 = scmp.ne.s32.totalorder %s131, %s133
    %p140 = scmp.eq.s32.totalorder %s18, 1
    %p141 = por %p139, %p140
    %p142 = scmp.ne.s32.totalorder %s133, %s134
    %p143 = scmp.eq.s32.totalorder %s18, 0
    %p144 = por %p142, %p143
    %p145 = scmp.ne.s32.totalorder %s133, %s134
    %p146 = scmp.eq.s32.totalorder %s19, 1
    %p147 = por %p145, %p146
    %p149 = scmp.ne.s32.totalorder %s134, %s148
    %p150 = scmp.eq.s32.totalorder %s19, 0
    %p151 = por %p149, %p150
    %s153 = sadd.s32 %s152, 1
    %p156 = scmp.eq.s32.totalorder %s13, 1
    %p157 = scmp.ne.s32.totalorder %s152, %s154
    %p158 = scmp.eq.s32.totalorder %s13, 0
    %p159 = por %p157, %p158
    %p160 = scmp.ne.s32.totalorder %s152, %s154
    %p161 = scmp.eq.s32.totalorder %s18, 1
    %p162 = por %p160, %p161
    %p163 = scmp.ne.s32.totalorder %s154, %s155
    %p164 = scmp.eq.s32.totalorder %s18, 0
    %p165 = por %p163, %p164
    %p166 = scmp.ne.s32.totalorder %s154, %s155
    %p167 = scmp.eq.s32.totalorder %s19, 1
    %p168 = por %p166, %p167
    %p170 = scmp.ne.s32.totalorder %s155, %s169
    %p171 = scmp.eq.s32.totalorder %s19, 0
    %p172 = por %p170, %p171
    %s173 = ssub.s32 %s13, %s20
    %p174 = scmp.eq.s32.totalorder %s173, 0
    %s176 = sadd.s32 %s175, 1
    %s177 = scalar_select %p174, %s175, %s176
    %p180 = pneg %p174
    %p181 = scmp.eq.s32.totalorder %s13, 1
    %p182 = por %p180, %p181
    %p183 = scmp.ne.s32.totalorder %s175, %s178
    %p184 = scmp.eq.s32.totalorder %s13, 0
    %p185 = por %p183, %p184
    %p186 = scmp.ne.s32.totalorder %s175, %s178
    %p187 = scmp.eq.s32.totalorder %s18, 1
    %p188 = por %p186, %p187
    %p189 = scmp.ne.s32.totalorder %s178, %s179
    %p190 = scmp.eq.s32.totalorder %s18, 0
    %p191 = por %p189, %p190
    %p192 = scmp.ne.s32.totalorder %s178, %s179
    %p193 = scmp.eq.s32.totalorder %s19, 1
    %p194 = por %p192, %p193
    %p196 = scmp.ne.s32.totalorder %s179, %s195
    %p197 = scmp.eq.s32.totalorder %s19, 0
    %p198 = por %p196, %p197
    %p199 = scmp.le.s32.totalorder 1, %s13
    %p200 = scmp.lt.s32.totalorder %s13, 3
    %p201 = pnand %p199, %p200
    %p202 = pneg %p201
    // Predicated region
    $region9: #{fwd.1} parent=5 // pred_check
      _
    $region10: #{fwd.1} parent=5 // pred_check_branch
      %204 = sbr.rel (%p201) target = $region12
    $region11: #{fwd.1} parent=5 // pred_region
      %s205 = ssub.s32 %s13, 1
      // Predicated region
      $region13: #{fwd.1} parent=11 // pred_check
        %p206 = pneg %p60
      $region14: #{fwd.1} parent=11 // pred_check_branch
        %208 = sbr.rel (%p206) target = $region16
      $region15: #{fwd.1} parent=11 // pred_region
        _
      $region16: #{fwd.1} parent=11 // pred_fallthru
        _
      // Predicated region
      $region17: #{fwd.1} parent=11 // pred_check
        %p209 = pneg %p81
      $region18: #{fwd.1} parent=11 // pred_check_branch
        %211 = sbr.rel (%p209) target = $region20
      $region19: #{fwd.1} parent=11 // pred_region
        _
      $region20: #{fwd.1} parent=11 // pred_fallthru
        _
      // Predicated region
      $region21: #{fwd.1} parent=11 // pred_check
        %p212 = pneg %p102
      $region22: #{fwd.1} parent=11 // pred_check_branch
        %214 = sbr.rel (%p212) target = $region24
      $region23: #{fwd.1} parent=11 // pred_region
        _
      $region24: #{fwd.1} parent=11 // pred_fallthru
        _
      // Predicated region
      $region25: #{fwd.1} parent=11 // pred_check
        %p215 = pneg %p123
      $region26: #{fwd.1} parent=11 // pred_check_branch
        %217 = sbr.rel (%p215) target = $region28
      $region27: #{fwd.1} parent=11 // pred_region
        _
      $region28: #{fwd.1} parent=11 // pred_fallthru
        _
      // Predicated region
      $region29: #{fwd.1} parent=11 // pred_check
        %p218 = pneg %p144
      $region30: #{fwd.1} parent=11 // pred_check_branch
        %220 = sbr.rel (%p218) target = $region32
      $region31: #{fwd.1} parent=11 // pred_region
        _
      $region32: #{fwd.1} parent=11 // pred_fallthru
        _
      // Predicated region
      $region33: #{fwd.1} parent=11 // pred_check
        %p221 = pneg %p165
      $region34: #{fwd.1} parent=11 // pred_check_branch
        %223 = sbr.rel (%p221) target = $region36
      $region35: #{fwd.1} parent=11 // pred_region
        _
      $region36: #{fwd.1} parent=11 // pred_fallthru
        _
    $region12: #{fwd.1} parent=5 // pred_fallthru
      _
    %p224 = scmp.lt.s32.totalorder %s13, 2
    // Predicated region
    $region37: #{fwd.1} parent=5 // pred_check
      %p225 = pneg %p224
    $region38: #{fwd.1} parent=5 // pred_check_branch
      %227 = sbr.rel (%p225) target = $region40
    $region39: #{fwd.1} parent=5 // pred_region
      // Predicated region
      $region41: #{fwd.1} parent=39 // pred_check
        %p228 = pneg %p33
      $region42: #{fwd.1} parent=39 // pred_check_branch
        %230 = sbr.rel (%p228) target = $region44
      $region43: #{fwd.1} parent=39 // pred_region
        %s231 = smul.u32 16, %s13
        %p232 = scmp.lt.s32.totalorder %s231, 31
        %s233 = scalar_select %p232, %s231, 31
        %s234 = smul.addr %s233, 8
        %s235 = scalar_lea.vmem %s0, %s234
        %s236 = smul.u32 16, %s13
      $region44: #{fwd.1} parent=39 // pred_fallthru
        _
    $region40: #{fwd.1} parent=5 // pred_fallthru
      _
    %p237 = scmp.le.s32.totalorder 1, %s13
    %p238 = scmp.lt.s32.totalorder %s13, 3
    %p239 = pnand %p237, %p238
    %p240 = pneg %p239
    // Predicated region
    $region45: #{fwd.1} parent=5 // pred_check
      _
    $region46: #{fwd.1} parent=5 // pred_check_branch
      %242 = sbr.rel (%p239) target = $region48
    $region47: #{fwd.1} parent=5 // pred_region
      %s243 = ssub.s32 %s13, 1
      %s244 = smul.u32 16, %s18
      %p245 = scmp.lt.s32.totalorder %s244, 31
      %s246 = scalar_select %p245, %s244, 31
      %s247 = smul.addr %s246, 8
      %s248 = scalar_lea.vmem %s0, %s247
      %p249 = pneg %p39
      %p250 = pneg %p36
      %p251 = pneg %p60
      %p252 = pneg %p57
      %p253 = pneg %p81
      %p254 = pneg %p78
      %p255 = pneg %p102
      %p256 = pneg %p99
      %p257 = pneg %p123
      %p258 = pneg %p120
      %p259 = pneg %p144
      %p260 = pneg %p141
      %p261 = pneg %p165
      %p262 = pneg %p162
      %p263 = pneg %p191
      %p264 = pneg %p188
      %s265 = smul.u32 16, %s18
      %p266 = scmp.lt.s32.totalorder %s265, 31
      %s267 = scalar_select %p266, %s265, 31
      %s268 = smul.addr %s267, 8
      %s269 = scalar_lea.vmem %s7, %s268
      %s270 = smul.u32 16, %s18
      %p271 = scmp.lt.s32.totalorder %s270, 31
      %s272 = scalar_select %p271, %s270, 31
      %s273 = smul.addr %s272, 8
      %s274 = scalar_lea.vmem %s0, %s273
      %s275 = smul.u32 16, %s18
      %s276 = smul.u32 16, %s18
      %p277 = scmp.lt.s32.totalorder %s276, 31
      %s278 = scalar_select %p277, %s276, 31
      %s279 = smul.addr %s278, 8
      %s280 = scalar_lea.vmem %s7, %s279
      %s281 = smul.u32 16, %s18
      %v283 = vld [vmem:[%s274] sm:$0xff]
      %v284 = vld [vmem:[%s274 + $0x8] sm:$0xff]
      %v285 = vld [vmem:[%s274 + $0x10] sm:$0xff]
      %v286 = vld [vmem:[%s274 + $0x18] sm:$0xff]
      %v287 = vld [vmem:[%s274 + $0x20] sm:$0xff]
      %v288 = vld [vmem:[%s274 + $0x28] sm:$0xff]
      %v289 = vld [vmem:[%s274 + $0x30] sm:$0xff]
      %v290 = vld [vmem:[%s274 + $0x38] sm:$0xff]
      %v291 = vld [vmem:[%s274 + $0x40] sm:$0xff]
      %v292 = vld [vmem:[%s274 + $0x48] sm:$0xff]
      %v293 = vld [vmem:[%s274 + $0x50] sm:$0xff]
      %v294 = vld [vmem:[%s274 + $0x58] sm:$0xff]
      %v295 = vld [vmem:[%s274 + $0x60] sm:$0xff]
      %v296 = vld [vmem:[%s274 + $0x68] sm:$0xff]
      %v297 = vld [vmem:[%s274 + $0x70] sm:$0xff]
      %v298 = vld [vmem:[%s274 + $0x78] sm:$0xff]
      %v299 = vpack.c.bf16 %v284, %v283
      %v300 = vpack.c.bf16 %v286, %v285
      %v301 = vpack.c.bf16 %v288, %v287
      %v302 = vpack.c.bf16 %v290, %v289
      %v303 = vpack.c.bf16 %v292, %v291
      %v304 = vpack.c.bf16 %v294, %v293
      %v305 = vpack.c.bf16 %v296, %v295
      %v306 = vpack.c.bf16 %v298, %v297
      %v307 = vld [vmem:[%s1] sm:$0xf]
      %v308 = vld [vmem:[%s1 + $0x4] sm:$0xf]
      %v309 = vld [vmem:[%s2] sm:$0x1]
      %v311 = vperm.slane %v309, 0
      %v315 = vunpack.c.l.b16 %v307
      %v316 = vunpack.c.l.b16 %v308
      %v317 = vpack.c.b16 %v316, %v315
      %vm319 = vcmask 130048
      %v321 = vsel %vm319, %v299, 0
      %v324 = vsel %vm319, %v300, 0
      %v327 = vsel %vm319, %v301, 0
      %v330 = vsel %vm319, %v302, 0
      %v333 = vsel %vm319, %v303, 0
      %v336 = vsel %vm319, %v304, 0
      %v339 = vsel %vm319, %v305, 0
      %v342 = vsel %vm319, %v306, 0
      %344 = vmatpush.bf16.msra.mxu0 0
      %345 = vmatpush.bf16.msra.mxu0 0
      %346 = vmatpush.bf16.msra.mxu0 0
      %347 = vmatpush.bf16.msra.mxu0 0
      %348 = vmatpush.bf16.msra.mxu0 0
      %349 = vmatpush.bf16.msra.mxu0 0
      %350 = vmatpush.bf16.msra.mxu0 0
      %351 = vmatpush.bf16.msra.mxu0 %v317
      %352 = vmatmul.bf16.gmra.mxu0 %v321
      %v353 = vpop.f32.mrf.mxu0
      %v354 = vadd.f32 %v311, %v353
      %v355 = vpop.f32.mrf.mxu0
      %v356 = vadd.f32 %v311, %v355
      %357 = vmatmul.bf16.gmra.mxu0 %v324
      %v358 = vpop.f32.mrf.mxu0
      %v359 = vadd.f32 %v311, %v358
      %v360 = vpop.f32.mrf.mxu0
      %v361 = vadd.f32 %v311, %v360
      %362 = vmatmul.bf16.gmra.mxu0 %v327
      %v363 = vpop.f32.mrf.mxu0
      %v364 = vadd.f32 %v311, %v363
      %v365 = vpop.f32.mrf.mxu0
      %v366 = vadd.f32 %v311, %v365
      %367 = vmatmul.bf16.gmra.mxu0 %v330
      %v368 = vpop.f32.mrf.mxu0
      %v369 = vadd.f32 %v311, %v368
      %v370 = vpop.f32.mrf.mxu0
      %v371 = vadd.f32 %v311, %v370
      %372 = vmatmul.bf16.gmra.mxu0 %v333
      %v373 = vpop.f32.mrf.mxu0
      %v374 = vadd.f32 %v311, %v373
      %v375 = vpop.f32.mrf.mxu0
      %v376 = vadd.f32 %v311, %v375
      %377 = vmatmul.bf16.gmra.mxu0 %v336
      %v378 = vpop.f32.mrf.mxu0
      %v379 = vadd.f32 %v311, %v378
      %v380 = vpop.f32.mrf.mxu0
      %v381 = vadd.f32 %v311, %v380
      %382 = vmatmul.bf16.gmra.mxu0 %v339
      %v383 = vpop.f32.mrf.mxu0
      %v384 = vadd.f32 %v311, %v383
      %v385 = vpop.f32.mrf.mxu0
      %v386 = vadd.f32 %v311, %v385
      %387 = vmatmul.bf16.gmra.mxu0 %v342
      %v388 = vpop.f32.mrf.mxu0
      %v389 = vadd.f32 %v311, %v388
      %v390 = vpop.f32.mrf.mxu0
      %v391 = vadd.f32 %v311, %v390
      %392 = vdwg.mxu0
      %v393 = vmax.f32 %v354, 0.0
      %v394 = vmax.f32 %v356, 0.0
      %v395 = vmax.f32 %v359, 0.0
      %v396 = vmax.f32 %v361, 0.0
      %v397 = vmax.f32 %v364, 0.0
      %v398 = vmax.f32 %v366, 0.0
      %v399 = vmax.f32 %v369, 0.0
      %v400 = vmax.f32 %v371, 0.0
      %v401 = vmax.f32 %v374, 0.0
      %v402 = vmax.f32 %v376, 0.0
      %v403 = vmax.f32 %v379, 0.0
      %v404 = vmax.f32 %v381, 0.0
      %v405 = vmax.f32 %v384, 0.0
      %v406 = vmax.f32 %v386, 0.0
      %v407 = vmax.f32 %v389, 0.0
      %v408 = vmax.f32 %v391, 0.0
      %v409 = vpack.c.bf16 %v394, %v393
      %v410 = vpack.c.bf16 %v396, %v395
      %v411 = vpack.c.bf16 %v398, %v397
      %v412 = vpack.c.bf16 %v400, %v399
      %v413 = vpack.c.bf16 %v402, %v401
      %v414 = vpack.c.bf16 %v404, %v403
      %v415 = vpack.c.bf16 %v406, %v405
      %v416 = vpack.c.bf16 %v408, %v407
      %v417 = vld [vmem:[%s3] sm:$0xf]
      %v418 = vld [vmem:[%s3 + $0x4] sm:$0xf]
      %v419 = vld [vmem:[%s3 + $0x8] sm:$0xf]
      %v420 = vld [vmem:[%s3 + $0xc] sm:$0xf]
      %v421 = vld [vmem:[%s3 + $0x10] sm:$0xf]
      %v422 = vld [vmem:[%s3 + $0x14] sm:$0xf]
      %v423 = vld [vmem:[%s3 + $0x18] sm:$0xf]
      %v424 = vld [vmem:[%s3 + $0x1c] sm:$0xf]
      %v425 = vld [vmem:[%s3 + $0x20] sm:$0xf]
      %v426 = vld [vmem:[%s3 + $0x24] sm:$0xf]
      %v427 = vld [vmem:[%s3 + $0x28] sm:$0xf]
      %v428 = vld [vmem:[%s3 + $0x2c] sm:$0xf]
      %v429 = vld [vmem:[%s3 + $0x30] sm:$0xf]
      %v430 = vld [vmem:[%s3 + $0x34] sm:$0xf]
      %v431 = vld [vmem:[%s3 + $0x38] sm:$0xf]
      %v432 = vld [vmem:[%s3 + $0x3c] sm:$0xf]
      %v433 = vld [vmem:[%s4] sm:$0x1]
      %v435 = vperm.slane %v433, 0
      %v453 = vunpack.c.l.b16 %v417
      %v454 = vunpack.c.l.b16 %v418
      %v455 = vunpack.c.l.b16 %v419
      %v456 = vunpack.c.l.b16 %v420
      %v457 = vunpack.c.l.b16 %v421
      %v458 = vunpack.c.l.b16 %v422
      %v459 = vunpack.c.l.b16 %v423
      %v460 = vunpack.c.l.b16 %v424
      %v461 = vunpack.c.l.b16 %v425
      %v462 = vunpack.c.l.b16 %v426
      %v463 = vunpack.c.l.b16 %v427
      %v464 = vunpack.c.l.b16 %v428
      %v465 = vunpack.c.l.b16 %v429
      %v466 = vunpack.c.l.b16 %v430
      %v467 = vunpack.c.l.b16 %v431
      %v468 = vunpack.c.l.b16 %v432
      %v469 = vpack.c.b16 %v454, %v453
      %v470 = vpack.c.b16 %v456, %v455
      %v471 = vpack.c.b16 %v458, %v457
      %v472 = vpack.c.b16 %v460, %v459
      %v473 = vpack.c.b16 %v462, %v461
      %v474 = vpack.c.b16 %v464, %v463
      %v475 = vpack.c.b16 %v466, %v465
      %v476 = vpack.c.b16 %v468, %v467
      %485 = vmatpush.bf16.msra.mxu0 %v476
      %486 = vmatpush.bf16.msra.mxu0 %v475
      %487 = vmatpush.bf16.msra.mxu0 %v474
      %488 = vmatpush.bf16.msra.mxu0 %v473
      %489 = vmatpush.bf16.msra.mxu0 %v472
      %490 = vmatpush.bf16.msra.mxu0 %v471
      %491 = vmatpush.bf16.msra.mxu0 %v470
      %492 = vmatpush.bf16.msra.mxu0 %v469
      %493 = vmatmul.bf16.gmra.mxu0 %v409
      %v494 = vpop.f32.mrf.mxu0
      %v495 = vadd.f32 %v435, %v494
      %v496 = vpop.f32.mrf.mxu0
      %v497 = vadd.f32 %v435, %v496
      %498 = vmatmul.bf16.gmra.mxu0 %v410
      %v499 = vpop.f32.mrf.mxu0
      %v500 = vadd.f32 %v435, %v499
      %v501 = vpop.f32.mrf.mxu0
      %v502 = vadd.f32 %v435, %v501
      %503 = vmatmul.bf16.gmra.mxu0 %v411
      %v504 = vpop.f32.mrf.mxu0
      %v505 = vadd.f32 %v435, %v504
      %v506 = vpop.f32.mrf.mxu0
      %v507 = vadd.f32 %v435, %v506
      %508 = vmatmul.bf16.gmra.mxu0 %v412
      %v509 = vpop.f32.mrf.mxu0
      %v510 = vadd.f32 %v435, %v509
      %v511 = vpop.f32.mrf.mxu0
      %v512 = vadd.f32 %v435, %v511
      %513 = vmatmul.bf16.gmra.mxu0 %v413
      %v514 = vpop.f32.mrf.mxu0
      %v515 = vadd.f32 %v435, %v514
      %v516 = vpop.f32.mrf.mxu0
      %v517 = vadd.f32 %v435, %v516
      %518 = vmatmul.bf16.gmra.mxu0 %v414
      %v519 = vpop.f32.mrf.mxu0
      %v520 = vadd.f32 %v435, %v519
      %v521 = vpop.f32.mrf.mxu0
      %v522 = vadd.f32 %v435, %v521
      %523 = vmatmul.bf16.gmra.mxu0 %v415
      %v524 = vpop.f32.mrf.mxu0
      %v525 = vadd.f32 %v435, %v524
      %v526 = vpop.f32.mrf.mxu0
      %v527 = vadd.f32 %v435, %v526
      %528 = vmatmul.bf16.gmra.mxu0 %v416
      %v529 = vpop.f32.mrf.mxu0
      %v530 = vadd.f32 %v435, %v529
      %v531 = vpop.f32.mrf.mxu0
      %v532 = vadd.f32 %v435, %v531
      %533 = vdwg.mxu0
      %v534 = vmax.f32 %v495, 0.0
      %v535 = vmax.f32 %v497, 0.0
      %v536 = vmax.f32 %v500, 0.0
      %v537 = vmax.f32 %v502, 0.0
      %v538 = vmax.f32 %v505, 0.0
      %v539 = vmax.f32 %v507, 0.0
      %v540 = vmax.f32 %v510, 0.0
      %v541 = vmax.f32 %v512, 0.0
      %v542 = vmax.f32 %v515, 0.0
      %v543 = vmax.f32 %v517, 0.0
      %v544 = vmax.f32 %v520, 0.0
      %v545 = vmax.f32 %v522, 0.0
      %v546 = vmax.f32 %v525, 0.0
      %v547 = vmax.f32 %v527, 0.0
      %v548 = vmax.f32 %v530, 0.0
      %v549 = vmax.f32 %v532, 0.0
      %v550 = vpack.c.bf16 %v535, %v534
      %v551 = vpack.c.bf16 %v537, %v536
      %v552 = vpack.c.bf16 %v539, %v538
      %v553 = vpack.c.bf16 %v541, %v540
      %v554 = vpack.c.bf16 %v543, %v542
      %v555 = vpack.c.bf16 %v545, %v544
      %v556 = vpack.c.bf16 %v547, %v546
      %v557 = vpack.c.bf16 %v549, %v548
      %v558 = vld [vmem:[%s5] sm:$0xf]
      %v559 = vld [vmem:[%s5 + $0x4] sm:$0xf]
      %v560 = vld [vmem:[%s5 + $0x8] sm:$0xf]
      %v561 = vld [vmem:[%s5 + $0xc] sm:$0xf]
      %v562 = vld [vmem:[%s5 + $0x10] sm:$0xf]
      %v563 = vld [vmem:[%s5 + $0x14] sm:$0xf]
      %v564 = vld [vmem:[%s5 + $0x18] sm:$0xf]
      %v565 = vld [vmem:[%s5 + $0x1c] sm:$0xf]
      %v566 = vld [vmem:[%s5 + $0x20] sm:$0xf]
      %v567 = vld [vmem:[%s5 + $0x24] sm:$0xf]
      %v568 = vld [vmem:[%s5 + $0x28] sm:$0xf]
      %v569 = vld [vmem:[%s5 + $0x2c] sm:$0xf]
      %v570 = vld [vmem:[%s5 + $0x30] sm:$0xf]
      %v571 = vld [vmem:[%s5 + $0x34] sm:$0xf]
      %v572 = vld [vmem:[%s5 + $0x38] sm:$0xf]
      %v573 = vld [vmem:[%s5 + $0x3c] sm:$0xf]
      %v574 = vld [vmem:[%s6] sm:$0x1]
      %v576 = vperm.slane %v574, 0
      %v594 = vunpack.c.l.b16 %v558
      %v595 = vunpack.c.l.b16 %v559
      %v596 = vunpack.c.l.b16 %v560
      %v597 = vunpack.c.l.b16 %v561
      %v598 = vunpack.c.l.b16 %v562
      %v599 = vunpack.c.l.b16 %v563
      %v600 = vunpack.c.l.b16 %v564
      %v601 = vunpack.c.l.b16 %v565
      %v602 = vunpack.c.l.b16 %v566
      %v603 = vunpack.c.l.b16 %v567
      %v604 = vunpack.c.l.b16 %v568
      %v605 = vunpack.c.l.b16 %v569
      %v606 = vunpack.c.l.b16 %v570
      %v607 = vunpack.c.l.b16 %v571
      %v608 = vunpack.c.l.b16 %v572
      %v609 = vunpack.c.l.b16 %v573
      %v610 = vpack.c.b16 %v595, %v594
      %v611 = vpack.c.b16 %v597, %v596
      %v612 = vpack.c.b16 %v599, %v598
      %v613 = vpack.c.b16 %v601, %v600
      %v614 = vpack.c.b16 %v603, %v602
      %v615 = vpack.c.b16 %v605, %v604
      %v616 = vpack.c.b16 %v607, %v606
      %v617 = vpack.c.b16 %v609, %v608
      %626 = vmatpush.bf16.msra.mxu0 %v617
      %627 = vmatpush.bf16.msra.mxu0 %v616
      %628 = vmatpush.bf16.msra.mxu0 %v615
      %629 = vmatpush.bf16.msra.mxu0 %v614
      %630 = vmatpush.bf16.msra.mxu0 %v613
      %631 = vmatpush.bf16.msra.mxu0 %v612
      %632 = vmatpush.bf16.msra.mxu0 %v611
      %633 = vmatpush.bf16.msra.mxu0 %v610
      %634 = vmatmul.bf16.gmra.mxu0 %v550
      %v635 = vpop.f32.mrf.mxu0
      %v636 = vadd.f32 %v576, %v635
      %v637 = vpop.f32.mrf.mxu0
      %v638 = vadd.f32 %v576, %v637
      %639 = vmatmul.bf16.gmra.mxu0 %v551
      %v640 = vpop.f32.mrf.mxu0
      %v641 = vadd.f32 %v576, %v640
      %v642 = vpop.f32.mrf.mxu0
      %v643 = vadd.f32 %v576, %v642
      %644 = vmatmul.bf16.gmra.mxu0 %v552
      %v645 = vpop.f32.mrf.mxu0
      %v646 = vadd.f32 %v576, %v645
      %v647 = vpop.f32.mrf.mxu0
      %v648 = vadd.f32 %v576, %v647
      %649 = vmatmul.bf16.gmra.mxu0 %v553
      %v650 = vpop.f32.mrf.mxu0
      %v651 = vadd.f32 %v576, %v650
      %v652 = vpop.f32.mrf.mxu0
      %v653 = vadd.f32 %v576, %v652
      %654 = vmatmul.bf16.gmra.mxu0 %v554
      %v655 = vpop.f32.mrf.mxu0
      %v656 = vadd.f32 %v576, %v655
      %v657 = vpop.f32.mrf.mxu0
      %v658 = vadd.f32 %v576, %v657
      %659 = vmatmul.bf16.gmra.mxu0 %v555
      %v660 = vpop.f32.mrf.mxu0
      %v661 = vadd.f32 %v576, %v660
      %v662 = vpop.f32.mrf.mxu0
      %v663 = vadd.f32 %v576, %v662
      %664 = vmatmul.bf16.gmra.mxu0 %v556
      %v665 = vpop.f32.mrf.mxu0
      %v666 = vadd.f32 %v576, %v665
      %v667 = vpop.f32.mrf.mxu0
      %v668 = vadd.f32 %v576, %v667
      %669 = vmatmul.bf16.gmra.mxu0 %v557
      %v670 = vpop.f32.mrf.mxu0
      %v671 = vadd.f32 %v576, %v670
      %v672 = vpop.f32.mrf.mxu0
      %v673 = vadd.f32 %v576, %v672
      %674 = vdwg.mxu0
      %675 = vst [vmem:[%s280] sm:$0xff] %v636
      %676 = vst [vmem:[%s280 + $0x8] sm:$0xff] %v638
      %677 = vst [vmem:[%s280 + $0x10] sm:$0xff] %v641
      %678 = vst [vmem:[%s280 + $0x18] sm:$0xff] %v643
      %679 = vst [vmem:[%s280 + $0x20] sm:$0xff] %v646
      %680 = vst [vmem:[%s280 + $0x28] sm:$0xff] %v648
      %681 = vst [vmem:[%s280 + $0x30] sm:$0xff] %v651
      %682 = vst [vmem:[%s280 + $0x38] sm:$0xff] %v653
      %683 = vst [vmem:[%s280 + $0x40] sm:$0xff] %v656
      %684 = vst [vmem:[%s280 + $0x48] sm:$0xff] %v658
      %685 = vst [vmem:[%s280 + $0x50] sm:$0xff] %v661
      %686 = vst [vmem:[%s280 + $0x58] sm:$0xff] %v663
      %687 = vst [vmem:[%s280 + $0x60] sm:$0xff] %v666
      %688 = vst [vmem:[%s280 + $0x68] sm:$0xff] %v668
      %689 = vst [vmem:[%s280 + $0x70] sm:$0xff] %v671
      %690 = vst [vmem:[%s280 + $0x78] sm:$0xff] %v673
      %s691 = smul.u32 16, %s18
      %p692 = scmp.lt.s32.totalorder %s691, 31
      %s693 = scalar_select %p692, %s691, 31
      %s694 = smul.addr %s693, 8
      %s695 = scalar_lea.vmem %s7, %s694
      // Predicated region
      $region49: #{fwd.1} parent=47 // pred_check
        %p696 = pneg %p188
      $region50: #{fwd.1} parent=47 // pred_check_branch
        %698 = sbr.rel (%p696) target = $region52
      $region51: #{fwd.1} parent=47 // pred_region
        %s699 = smul.u32 16, %s18
      $region52: #{fwd.1} parent=47 // pred_fallthru
        _
    $region48: #{fwd.1} parent=5 // pred_fallthru
      _
    %p700 = scmp.le.s32.totalorder 2, %s13
    // Predicated region
    $region53: #{fwd.1} parent=5 // pred_check
      %p701 = pneg %p700
    $region54: #{fwd.1} parent=5 // pred_check_branch
      %703 = sbr.rel (%p701) target = $region56
    $region55: #{fwd.1} parent=5 // pred_region
      %s704 = ssub.s32 %s13, 2
      // Predicated region
      $region57: #{fwd.1} parent=55 // pred_check
        %p705 = pneg %p194
      $region58: #{fwd.1} parent=55 // pred_check_branch
        %707 = sbr.rel (%p705) target = $region60
      $region59: #{fwd.1} parent=55 // pred_region
        %s708 = smul.u32 16, %s19
        %p709 = scmp.lt.s32.totalorder %s708, 31
        %s710 = scalar_select %p709, %s708, 31
        %s711 = smul.addr %s710, 8
        %s712 = scalar_lea.vmem %s7, %s711
      $region60: #{fwd.1} parent=55 // pred_fallthru
        _
    $region56: #{fwd.1} parent=5 // pred_fallthru
      _
  $region6: #{fwd.1} parent=0 // loop_footer
    %s17 = sadd.s32 1, %s13
  $region7: #{fwd.1} parent=0 // loop_footer_branch
    %12 = sbr.rel target = $region3
  $region8: #{fwd.1} parent=0 // loop_exit
    _

</llo_original>
